<compile_context>
chip_gen: v7x
topology: tpu7x:2x2x1
jax: 0.10.0
libtpu: 0.0.40
codegen_flags: <defaults>
</compile_context>

<pallas_src>
from functools import partial

import jax
import jax.numpy as jnp
from jax.experimental import pallas as pl
from jax.experimental.pallas import tpu as pltpu


def _is_v7x():
    try:
        return "v7" in jax.devices()[0].device_kind.lower()
    except Exception:  # pragma: no cover - defensive; default to MRF path
        return False


# ------------------------- per-block compute (values) ----------------------

def _conv_taps(sig, *, K, dilation, masks):
    """K right-shifted, causally/batch-masked copies of the slab.

    sig: (C, B*L) float32, batch folded onto lanes.
    Tap k (tap-major, pairing with w[:, :, k]) is sig shifted right by
    s_k = (K-1-k)*dilation within each length-L segment, zero-filled; masks[k]
    (built once per block from an iota) zeroes both the causal prefix and any
    cross-batch leakage.
    """
    C, BL = sig.shape
    P = (K - 1) * dilation
    if P > 0:
        padded = jnp.concatenate([jnp.zeros((C, P), jnp.float32), sig], axis=1)
    else:
        padded = sig
    taps = []
    for k in range(K):
        shifted = padded[:, k * dilation:k * dilation + BL]   # sig[:, g - s_k]
        taps.append(jnp.where(masks[k], shifted, 0.0))
    return taps


def _temporal_block(x, w1, b1, w2, b2, wd, bd, *, K, dilation, L, per_tap):
    """One TemporalBlock on an in-VMEM (C_in, B*L) slab -> (C_out, B*L).

    out = relu( conv2(relu(conv1(x))) + downsample(x) ), convs causal+dilated,
    chomp folded in, dropout = identity (eval mode).
    """
    C_in, BL = x.shape
    C_out = w1.shape[0]

    # Loop-invariant masks, shared by both convs of this block.
    pos = jax.lax.broadcasted_iota(jnp.int32, (1, BL), 1)
    tmod = pos % L
    masks = [tmod >= (K - 1 - k) * dilation for k in range(K)]

    def conv(sig, w_flat, b, C):
        taps = _conv_taps(sig, K=K, dilation=dilation, masks=masks)
        if per_tap:
            # v7x: K accumulating MXU pushes (MRB accumulates in place),
            # no sublane-axis concat.
            h = jnp.zeros((C_out, BL), jnp.float32)
            for k in range(K):
                w_k = w_flat[:, k * C:(k + 1) * C]
                h = h + jnp.dot(w_k, taps[k],
                                preferred_element_type=jnp.float32)
        else:
            # v5e/v6e: single-push im2col matmul.
            im = jnp.concatenate(taps, axis=0)                 # (K*C, B*L)
            h = jnp.dot(w_flat, im, preferred_element_type=jnp.float32)
        return jnp.maximum(h + b, 0.0)

    h1 = conv(x, w1, b1, C_in)      # conv1 + chomp + relu (+ dropout = id)
    h2 = conv(h1, w2, b2, C_out)    # conv2 + chomp + relu (+ dropout = id)

    if wd is not None:              # 1x1 downsample residual: one slab matmul
        res = jnp.dot(wd, x, preferred_element_type=jnp.float32) + bd
    else:                           # C_in == C_out: identity residual
        res = x
    return jnp.maximum(h2 + res, 0.0)


# ------------------------------ Pallas kernel ------------------------------

def tcn_stack_kernel(*refs, layer_cfgs, L, per_tap):
    """Fused MixerModel forward: whole batch slab + whole block stack.

    refs = (x_ref, <per-layer param refs...>, out_ref)
      x_ref   : (C0, B*L)  float32 slab (batch folded onto lanes)
      per layer: w1, b1, w2, b2 [, wd, bd]  (wd/bd only if C_in != C_out)
      out_ref : (C_last, B*L)
    layer_cfgs: tuple of (K, dilation, has_downsample) per layer (static).
    """
    x_ref = refs[0]
    out_ref = refs[-1]
    param_refs = refs[1:-1]

    # Single slab load; all intermediates live in VMEM/vregs across the stack.
    h = x_ref[...].astype(jnp.float32)

    idx = 0
    for (K, dilation, has_downsample) in layer_cfgs:
        w1 = param_refs[idx][...]
        b1 = param_refs[idx + 1][...]
        w2 = param_refs[idx + 2][...]
        b2 = param_refs[idx + 3][...]
        idx += 4
        if has_downsample:
            wd = param_refs[idx][...]
            bd = param_refs[idx + 1][...]
            idx += 2
        else:
            wd = bd = None
        h = _temporal_block(h, w1, b1, w2, b2, wd, bd,
                            K=K, dilation=dilation, L=L, per_tap=per_tap)

    out_ref[...] = h.astype(out_ref.dtype)     # single slab store


# --------------------------------- wrapper ---------------------------------

def mixer_tcn_forward(x, blocks, *, per_tap=None):
    """x: (B, C0, L) in PyTorch NCL layout. blocks: list of (params, K, dilation)
    where params = (w1, b1, w2, b2, wd_or_None, bd_or_None) in kernel layout.
    Returns (B, C_last, L)."""
    B, C0, L = x.shape
    if per_tap is None:
        per_tap = _is_v7x()

    # One-off XLA relayout: fold batch onto the lane/time axis.
    x_slab = jnp.transpose(x, (1, 0, 2)).reshape(C0, B * L)

    flat_inputs = [x_slab]
    layer_cfgs = []
    flops = 0
    param_bytes = 0
    c_prev = C0
    for (params, K, dilation) in blocks:
        w1, b1, w2, b2, wd, bd = params
        C_out = w1.shape[0]
        has_ds = wd is not None
        flat_inputs += [w1, b1, w2, b2]
        if has_ds:
            flat_inputs += [wd, bd]
        layer_cfgs.append((K, dilation, has_ds))
        flops += 2 * B * L * C_out * (K * c_prev + K * C_out
                                      + (c_prev if has_ds else 0))
        param_bytes += sum(int(p.size) * 4 for p in (w1, b1, w2, b2))
        if has_ds:
            param_bytes += (int(wd.size) + int(bd.size)) * 4
        c_prev = C_out
    C_last = c_prev

    kernel = partial(tcn_stack_kernel, layer_cfgs=tuple(layer_cfgs), L=L,
                     per_tap=per_tap)

    vmem_spec = pl.BlockSpec(memory_space=pltpu.MemorySpace.VMEM)
    bytes_accessed = int(x.size) * 4 + param_bytes + B * C_last * L * 4

    out_slab = pl.pallas_call(
        kernel,
        out_shape=jax.ShapeDtypeStruct((C_last, B * L), x.dtype),
        in_specs=[vmem_spec] * len(flat_inputs),
        out_specs=vmem_spec,
        cost_estimate=pl.CostEstimate(flops=int(flops), transcendentals=0,
                                      bytes_accessed=int(bytes_accessed)),
        compiler_params=pltpu.CompilerParams(
            vmem_limit_bytes=32 * 1024 * 1024),
    )(*flat_inputs)

    # One-off XLA relayout back to NCL.
    return jnp.transpose(out_slab.reshape(C_last, B, L), (1, 0, 2))


# -------------------------- parameter construction -------------------------

def make_block_params(key, n_inputs, n_outputs, kernel_size):
    """Deterministic synthetic init mirroring TemporalBlock.__init__ shapes.

    Conv weights ~ N(0, 0.01); weight_norm reparam w = g * v / ||v|| applied
    explicitly (identity at init since g = ||v||); biases small uniform.
    Returns (torch_layout_params, kernel_layout_params).
    """
    ks = jax.random.split(key, 6)
    K = kernel_size
    v1 = 0.01 * jax.random.normal(ks[0], (n_outputs, n_inputs, K), jnp.float32)
    v2 = 0.01 * jax.random.normal(ks[1], (n_outputs, n_outputs, K), jnp.float32)

    def weight_norm(v):
        norm = jnp.sqrt(jnp.sum(v * v, axis=(1, 2), keepdims=True))
        g = norm                    # PyTorch weight_norm init: g = ||v||
        return g * v / norm

    w1 = weight_norm(v1)            # (C_out, C_in, K)
    w2 = weight_norm(v2)            # (C_out, C_out, K)
    b1 = 0.1 * jax.random.uniform(ks[2], (n_outputs,), jnp.float32, -1.0, 1.0)
    b2 = 0.1 * jax.random.uniform(ks[3], (n_outputs,), jnp.float32, -1.0, 1.0)

    if n_inputs != n_outputs:
        wd = 0.01 * jax.random.normal(ks[4], (n_outputs, n_inputs, 1), jnp.float32)
        bd = 0.1 * jax.random.uniform(ks[5], (n_outputs,), jnp.float32, -1.0, 1.0)
    else:
        wd = None                   # identity residual (res = x), like PyTorch
        bd = None

    torch_layout = (w1, b1, w2, b2, wd, bd)

    # Kernel layout: tap-major flattened weights, w_flat[co, k*C_in + ci] = w[co, ci, k].
    w1_k = jnp.transpose(w1, (0, 2, 1)).reshape(n_outputs, K * n_inputs)
    w2_k = jnp.transpose(w2, (0, 2, 1)).reshape(n_outputs, K * n_outputs)
    kernel_layout = (
        w1_k, b1[:, None],
        w2_k, b2[:, None],
        None if wd is None else wd[:, :, 0],
        None if bd is None else bd[:, None],
    )
    return torch_layout, kernel_layout


# ----------------------------- pure-JAX reference --------------------------

def reference_block(x, torch_params, *, kernel_size, dilation):
    w1, b1, w2, b2, wd, bd = torch_params
    P = (kernel_size - 1) * dilation

    def causal_conv(inp, w, b):
        y = jax.lax.conv_general_dilated(
            inp, w, window_strides=(1,), padding=[(P, P)],
            rhs_dilation=(dilation,),
            dimension_numbers=('NCH', 'OIH', 'NCH'))
        if P > 0:
            y = y[:, :, :-P]                 # Chomp1d
        return y + b[None, :, None]

    h1 = jax.nn.relu(causal_conv(x, w1, b1))
    h2 = jax.nn.relu(causal_conv(h1, w2, b2))
    if wd is not None:
        res = jax.lax.conv_general_dilated(
            x, wd, window_strides=(1,), padding='VALID',
            dimension_numbers=('NCH', 'OIH', 'NCH')) + bd[None, :, None]
    else:
        res = x
    return jax.nn.relu(h2 + res)


def reference_forward(x, torch_blocks):
    h = x
    for (params, K, dilation) in torch_blocks:
        h = reference_block(h, params, kernel_size=K, dilation=dilation)
    return h


# ----------------------------------- main ----------------------------------

if __name__ == "__main__":
    # Small shapes consistent with the module's forward:
    # a 2-block TCN mixer stack, C: 4 -> 8 (downsample residual) -> 8 (identity).
    B, L = 2, 16
    kernel_size = 3
    layer_channels = [(4, 8), (8, 8)]
    dilations = [1, 2]                       # standard TCN schedule 2**i

    key = jax.random.PRNGKey(0)
    kx, kp = jax.random.split(key)
    x = jax.random.normal(kx, (B, layer_channels[0][0], L), jnp.float32)  # NCL

    torch_blocks, kernel_blocks = [], []
    pkeys = jax.random.split(kp, len(layer_channels))
    for (cin, cout), d, pk in zip(layer_channels, dilations, pkeys):
        tparams, kparams = make_block_params(pk, cin, cout, kernel_size)
        torch_blocks.append((tparams, kernel_size, d))
        kernel_blocks.append((kparams, kernel_size, d))

    out = mixer_tcn_forward(x, kernel_blocks)
    out = jax.block_until_ready(out)

    ref = jax.block_until_ready(reference_forward(x, torch_blocks))

    assert out.shape == (B, layer_channels[-1][1], L), out.shape
    max_err = float(jnp.max(jnp.abs(out - ref)))
    assert jnp.allclose(out, ref, atol=1e-4, rtol=1e-4), max_err
    print("KERNEL_OK")
</pallas_src>

<mosaic_0001>
module attributes {stable_mosaic.version = 11 : i64} {
  func.func @tcn_stack_kernel(%arg0: memref<4x32xf32, #tpu.memory_space<vmem>>, %arg1: memref<8x12xf32, #tpu.memory_space<vmem>>, %arg2: memref<8x1xf32, #tpu.memory_space<vmem>>, %arg3: memref<8x24xf32, #tpu.memory_space<vmem>>, %arg4: memref<8x1xf32, #tpu.memory_space<vmem>>, %arg5: memref<8x4xf32, #tpu.memory_space<vmem>>, %arg6: memref<8x1xf32, #tpu.memory_space<vmem>>, %arg7: memref<8x24xf32, #tpu.memory_space<vmem>>, %arg8: memref<8x1xf32, #tpu.memory_space<vmem>>, %arg9: memref<8x24xf32, #tpu.memory_space<vmem>>, %arg10: memref<8x1xf32, #tpu.memory_space<vmem>>, %arg11: memref<8x32xf32, #tpu.memory_space<vmem>>) attributes {dimension_semantics = [], scalar_prefetch = 0 : i64, scratch_operands = 0 : i64, tpu.core_type = #tpu.core_type<tc>} {
    %c0 = arith.constant 0 : index
    %c0_0 = arith.constant 0 : index
    %0 = vector.load %arg0[%c0, %c0_0] : memref<4x32xf32, #tpu.memory_space<vmem>>, vector<4x32xf32>
    %c0_1 = arith.constant 0 : index
    %c0_2 = arith.constant 0 : index
    %1 = vector.load %arg1[%c0_1, %c0_2] : memref<8x12xf32, #tpu.memory_space<vmem>>, vector<8x12xf32>
    %c0_3 = arith.constant 0 : index
    %c0_4 = arith.constant 0 : index
    %2 = vector.load %arg2[%c0_3, %c0_4] : memref<8x1xf32, #tpu.memory_space<vmem>>, vector<8x1xf32>
    %c0_5 = arith.constant 0 : index
    %c0_6 = arith.constant 0 : index
    %3 = vector.load %arg3[%c0_5, %c0_6] : memref<8x24xf32, #tpu.memory_space<vmem>>, vector<8x24xf32>
    %c0_7 = arith.constant 0 : index
    %c0_8 = arith.constant 0 : index
    %4 = vector.load %arg4[%c0_7, %c0_8] : memref<8x1xf32, #tpu.memory_space<vmem>>, vector<8x1xf32>
    %c0_9 = arith.constant 0 : index
    %c0_10 = arith.constant 0 : index
    %5 = vector.load %arg5[%c0_9, %c0_10] : memref<8x4xf32, #tpu.memory_space<vmem>>, vector<8x4xf32>
    %c0_11 = arith.constant 0 : index
    %c0_12 = arith.constant 0 : index
    %6 = vector.load %arg6[%c0_11, %c0_12] : memref<8x1xf32, #tpu.memory_space<vmem>>, vector<8x1xf32>
    %7 = tpu.iota {dimensions = array<i32: 1>} : vector<1x32xi32>
    %c16_i32 = arith.constant 16 : i32
    %c0_i32 = arith.constant 0 : i32
    %8 = arith.cmpi eq, %c16_i32, %c0_i32 : i32
    %c1_i32 = arith.constant 1 : i32
    %9 = arith.select %8, %c1_i32, %c16_i32 : i32
    %10 = vector.broadcast %9 : i32 to vector<1x32xi32>
    %11 = arith.remsi %7, %10 : vector<1x32xi32>
    %c0_i32_13 = arith.constant 0 : i32
    %12 = vector.broadcast %c0_i32_13 : i32 to vector<1x32xi32>
    %13 = arith.cmpi ne, %11, %12 : vector<1x32xi32>
    %c0_i32_14 = arith.constant 0 : i32
    %14 = vector.broadcast %c0_i32_14 : i32 to vector<1x32xi32>
    %15 = arith.cmpi slt, %11, %14 : vector<1x32xi32>
    %c0_i32_15 = arith.constant 0 : i32
    %16 = arith.cmpi slt, %9, %c0_i32_15 : i32
    %17 = vector.broadcast %16 : i1 to vector<1x32xi1>
    %18 = vector.broadcast %17 : vector<1x32xi1> to vector<1x32xi1>
    %19 = arith.xori %15, %18 : vector<1x32xi1>
    %20 = arith.andi %19, %13 : vector<1x32xi1>
    %21 = vector.broadcast %9 : i32 to vector<1x32xi32>
    %22 = arith.addi %11, %21 : vector<1x32xi32>
    %23 = arith.select %20, %22, %11 : vector<1x32xi1>, vector<1x32xi32>
    %c2_i32 = arith.constant 2 : i32
    %24 = vector.broadcast %c2_i32 : i32 to vector<1x32xi32>
    %25 = arith.cmpi sge, %23, %24 : vector<1x32xi32>
    %c1_i32_16 = arith.constant 1 : i32
    %26 = vector.broadcast %c1_i32_16 : i32 to vector<1x32xi32>
    %27 = arith.cmpi sge, %23, %26 : vector<1x32xi32>
    %c0_i32_17 = arith.constant 0 : i32
    %28 = vector.broadcast %c0_i32_17 : i32 to vector<1x32xi32>
    %29 = arith.cmpi sge, %23, %28 : vector<1x32xi32>
    %cst = arith.constant 0.000000e+00 : f32
    %30 = vector.broadcast %cst : f32 to vector<4x2xf32>
    %31 = tpu.concatenate %30, %0 in 1 : vector<4x2xf32>, vector<4x32xf32> -> vector<4x34xf32>
    %32 = vector.extract_strided_slice %31 {offsets = [0, 0], sizes = [4, 32], strides = [1, 1]} : vector<4x34xf32> to vector<4x32xf32>
    %cst_18 = arith.constant 0.000000e+00 : f32
    %33 = vector.shape_cast %25 : vector<1x32xi1> to vector<1x32xi1>
    %34 = vector.broadcast %33 : vector<1x32xi1> to vector<4x32xi1>
    %35 = vector.broadcast %cst_18 : f32 to vector<4x32xf32>
    %36 = arith.select %34, %32, %35 : vector<4x32xi1>, vector<4x32xf32>
    %37 = vector.extract_strided_slice %31 {offsets = [0, 1], sizes = [4, 32], strides = [1, 1]} : vector<4x34xf32> to vector<4x32xf32>
    %cst_19 = arith.constant 0.000000e+00 : f32
    %38 = vector.shape_cast %27 : vector<1x32xi1> to vector<1x32xi1>
    %39 = vector.broadcast %38 : vector<1x32xi1> to vector<4x32xi1>
    %40 = vector.broadcast %cst_19 : f32 to vector<4x32xf32>
    %41 = arith.select %39, %37, %40 : vector<4x32xi1>, vector<4x32xf32>
    %42 = vector.extract_strided_slice %31 {offsets = [0, 2], sizes = [4, 32], strides = [1, 1]} : vector<4x34xf32> to vector<4x32xf32>
    %cst_20 = arith.constant 0.000000e+00 : f32
    %43 = vector.shape_cast %29 : vector<1x32xi1> to vector<1x32xi1>
    %44 = vector.broadcast %43 : vector<1x32xi1> to vector<4x32xi1>
    %45 = vector.broadcast %cst_20 : f32 to vector<4x32xf32>
    %46 = arith.select %44, %42, %45 : vector<4x32xi1>, vector<4x32xf32>
    %47 = tpu.concatenate %36, %41, %46 in 0 : vector<4x32xf32>, vector<4x32xf32>, vector<4x32xf32> -> vector<12x32xf32>
    %cst_21 = arith.constant dense<0.000000e+00> : vector<8x32xf32>
    %48 = tpu.matmul %1, %47, %cst_21 {dimension_numbers = #tpu.dot_dimension_numbers<[1], [0], [0], [1], [0, 0, 1, 1], [], []>} : vector<8x12xf32>, vector<12x32xf32>, vector<8x32xf32> -> vector<8x32xf32>
    %49 = vector.broadcast %2 : vector<8x1xf32> to vector<8x32xf32>
    %50 = arith.addf %48, %49 : vector<8x32xf32>
    %cst_22 = arith.constant 0.000000e+00 : f32
    %51 = vector.broadcast %cst_22 : f32 to vector<8x32xf32>
    %52 = arith.maximumf %50, %51 : vector<8x32xf32>
    %cst_23 = arith.constant 0.000000e+00 : f32
    %53 = vector.broadcast %cst_23 : f32 to vector<8x2xf32>
    %54 = tpu.concatenate %53, %52 in 1 : vector<8x2xf32>, vector<8x32xf32> -> vector<8x34xf32>
    %55 = vector.extract_strided_slice %54 {offsets = [0, 0], sizes = [8, 32], strides = [1, 1]} : vector<8x34xf32> to vector<8x32xf32>
    %cst_24 = arith.constant 0.000000e+00 : f32
    %56 = vector.shape_cast %25 : vector<1x32xi1> to vector<1x32xi1>
    %57 = vector.broadcast %56 : vector<1x32xi1> to vector<8x32xi1>
    %58 = vector.broadcast %cst_24 : f32 to vector<8x32xf32>
    %59 = arith.select %57, %55, %58 : vector<8x32xi1>, vector<8x32xf32>
    %60 = vector.extract_strided_slice %54 {offsets = [0, 1], sizes = [8, 32], strides = [1, 1]} : vector<8x34xf32> to vector<8x32xf32>
    %cst_25 = arith.constant 0.000000e+00 : f32
    %61 = vector.shape_cast %27 : vector<1x32xi1> to vector<1x32xi1>
    %62 = vector.broadcast %61 : vector<1x32xi1> to vector<8x32xi1>
    %63 = vector.broadcast %cst_25 : f32 to vector<8x32xf32>
    %64 = arith.select %62, %60, %63 : vector<8x32xi1>, vector<8x32xf32>
    %65 = vector.extract_strided_slice %54 {offsets = [0, 2], sizes = [8, 32], strides = [1, 1]} : vector<8x34xf32> to vector<8x32xf32>
    %cst_26 = arith.constant 0.000000e+00 : f32
    %66 = vector.shape_cast %29 : vector<1x32xi1> to vector<1x32xi1>
    %67 = vector.broadcast %66 : vector<1x32xi1> to vector<8x32xi1>
    %68 = vector.broadcast %cst_26 : f32 to vector<8x32xf32>
    %69 = arith.select %67, %65, %68 : vector<8x32xi1>, vector<8x32xf32>
    %70 = tpu.concatenate %59, %64, %69 in 0 : vector<8x32xf32>, vector<8x32xf32>, vector<8x32xf32> -> vector<24x32xf32>
    %cst_27 = arith.constant dense<0.000000e+00> : vector<8x32xf32>
    %71 = tpu.matmul %3, %70, %cst_27 {dimension_numbers = #tpu.dot_dimension_numbers<[1], [0], [0], [1], [0, 0, 1, 1], [], []>} : vector<8x24xf32>, vector<24x32xf32>, vector<8x32xf32> -> vector<8x32xf32>
    %72 = vector.broadcast %4 : vector<8x1xf32> to vector<8x32xf32>
    %73 = arith.addf %71, %72 : vector<8x32xf32>
    %cst_28 = arith.constant 0.000000e+00 : f32
    %74 = vector.broadcast %cst_28 : f32 to vector<8x32xf32>
    %75 = arith.maximumf %73, %74 : vector<8x32xf32>
    %cst_29 = arith.constant dense<0.000000e+00> : vector<8x32xf32>
    %76 = tpu.matmul %5, %0, %cst_29 {dimension_numbers = #tpu.dot_dimension_numbers<[1], [0], [0], [1], [0, 0, 1, 1], [], []>} : vector<8x4xf32>, vector<4x32xf32>, vector<8x32xf32> -> vector<8x32xf32>
    %77 = vector.broadcast %6 : vector<8x1xf32> to vector<8x32xf32>
    %78 = arith.addf %76, %77 : vector<8x32xf32>
    %79 = arith.addf %75, %78 : vector<8x32xf32>
    %cst_30 = arith.constant 0.000000e+00 : f32
    %80 = vector.broadcast %cst_30 : f32 to vector<8x32xf32>
    %81 = arith.maximumf %79, %80 : vector<8x32xf32>
    %c0_31 = arith.constant 0 : index
    %c0_32 = arith.constant 0 : index
    %82 = vector.load %arg7[%c0_31, %c0_32] : memref<8x24xf32, #tpu.memory_space<vmem>>, vector<8x24xf32>
    %c0_33 = arith.constant 0 : index
    %c0_34 = arith.constant 0 : index
    %83 = vector.load %arg8[%c0_33, %c0_34] : memref<8x1xf32, #tpu.memory_space<vmem>>, vector<8x1xf32>
    %c0_35 = arith.constant 0 : index
    %c0_36 = arith.constant 0 : index
    %84 = vector.load %arg9[%c0_35, %c0_36] : memref<8x24xf32, #tpu.memory_space<vmem>>, vector<8x24xf32>
    %c0_37 = arith.constant 0 : index
    %c0_38 = arith.constant 0 : index
    %85 = vector.load %arg10[%c0_37, %c0_38] : memref<8x1xf32, #tpu.memory_space<vmem>>, vector<8x1xf32>
    %86 = tpu.iota {dimensions = array<i32: 1>} : vector<1x32xi32>
    %c16_i32_39 = arith.constant 16 : i32
    %c0_i32_40 = arith.constant 0 : i32
    %87 = arith.cmpi eq, %c16_i32_39, %c0_i32_40 : i32
    %c1_i32_41 = arith.constant 1 : i32
    %88 = arith.select %87, %c1_i32_41, %c16_i32_39 : i32
    %89 = vector.broadcast %88 : i32 to vector<1x32xi32>
    %90 = arith.remsi %86, %89 : vector<1x32xi32>
    %c0_i32_42 = arith.constant 0 : i32
    %91 = vector.broadcast %c0_i32_42 : i32 to vector<1x32xi32>
    %92 = arith.cmpi ne, %90, %91 : vector<1x32xi32>
    %c0_i32_43 = arith.constant 0 : i32
    %93 = vector.broadcast %c0_i32_43 : i32 to vector<1x32xi32>
    %94 = arith.cmpi slt, %90, %93 : vector<1x32xi32>
    %c0_i32_44 = arith.constant 0 : i32
    %95 = arith.cmpi slt, %88, %c0_i32_44 : i32
    %96 = vector.broadcast %95 : i1 to vector<1x32xi1>
    %97 = vector.broadcast %96 : vector<1x32xi1> to vector<1x32xi1>
    %98 = arith.xori %94, %97 : vector<1x32xi1>
    %99 = arith.andi %98, %92 : vector<1x32xi1>
    %100 = vector.broadcast %88 : i32 to vector<1x32xi32>
    %101 = arith.addi %90, %100 : vector<1x32xi32>
    %102 = arith.select %99, %101, %90 : vector<1x32xi1>, vector<1x32xi32>
    %c4_i32 = arith.constant 4 : i32
    %103 = vector.broadcast %c4_i32 : i32 to vector<1x32xi32>
    %104 = arith.cmpi sge, %102, %103 : vector<1x32xi32>
    %c2_i32_45 = arith.constant 2 : i32
    %105 = vector.broadcast %c2_i32_45 : i32 to vector<1x32xi32>
    %106 = arith.cmpi sge, %102, %105 : vector<1x32xi32>
    %c0_i32_46 = arith.constant 0 : i32
    %107 = vector.broadcast %c0_i32_46 : i32 to vector<1x32xi32>
    %108 = arith.cmpi sge, %102, %107 : vector<1x32xi32>
    %cst_47 = arith.constant 0.000000e+00 : f32
    %109 = vector.broadcast %cst_47 : f32 to vector<8x4xf32>
    %110 = tpu.concatenate %109, %81 in 1 : vector<8x4xf32>, vector<8x32xf32> -> vector<8x36xf32>
    %111 = vector.extract_strided_slice %110 {offsets = [0, 0], sizes = [8, 32], strides = [1, 1]} : vector<8x36xf32> to vector<8x32xf32>
    %cst_48 = arith.constant 0.000000e+00 : f32
    %112 = vector.shape_cast %104 : vector<1x32xi1> to vector<1x32xi1>
    %113 = vector.broadcast %112 : vector<1x32xi1> to vector<8x32xi1>
    %114 = vector.broadcast %cst_48 : f32 to vector<8x32xf32>
    %115 = arith.select %113, %111, %114 : vector<8x32xi1>, vector<8x32xf32>
    %116 = vector.extract_strided_slice %110 {offsets = [0, 2], sizes = [8, 32], strides = [1, 1]} : vector<8x36xf32> to vector<8x32xf32>
    %cst_49 = arith.constant 0.000000e+00 : f32
    %117 = vector.shape_cast %106 : vector<1x32xi1> to vector<1x32xi1>
    %118 = vector.broadcast %117 : vector<1x32xi1> to vector<8x32xi1>
    %119 = vector.broadcast %cst_49 : f32 to vector<8x32xf32>
    %120 = arith.select %118, %116, %119 : vector<8x32xi1>, vector<8x32xf32>
    %121 = vector.extract_strided_slice %110 {offsets = [0, 4], sizes = [8, 32], strides = [1, 1]} : vector<8x36xf32> to vector<8x32xf32>
    %cst_50 = arith.constant 0.000000e+00 : f32
    %122 = vector.shape_cast %108 : vector<1x32xi1> to vector<1x32xi1>
    %123 = vector.broadcast %122 : vector<1x32xi1> to vector<8x32xi1>
    %124 = vector.broadcast %cst_50 : f32 to vector<8x32xf32>
    %125 = arith.select %123, %121, %124 : vector<8x32xi1>, vector<8x32xf32>
    %126 = tpu.concatenate %115, %120, %125 in 0 : vector<8x32xf32>, vector<8x32xf32>, vector<8x32xf32> -> vector<24x32xf32>
    %cst_51 = arith.constant dense<0.000000e+00> : vector<8x32xf32>
    %127 = tpu.matmul %82, %126, %cst_51 {dimension_numbers = #tpu.dot_dimension_numbers<[1], [0], [0], [1], [0, 0, 1, 1], [], []>} : vector<8x24xf32>, vector<24x32xf32>, vector<8x32xf32> -> vector<8x32xf32>
    %128 = vector.broadcast %83 : vector<8x1xf32> to vector<8x32xf32>
    %129 = arith.addf %127, %128 : vector<8x32xf32>
    %cst_52 = arith.constant 0.000000e+00 : f32
    %130 = vector.broadcast %cst_52 : f32 to vector<8x32xf32>
    %131 = arith.maximumf %129, %130 : vector<8x32xf32>
    %cst_53 = arith.constant 0.000000e+00 : f32
    %132 = vector.broadcast %cst_53 : f32 to vector<8x4xf32>
    %133 = tpu.concatenate %132, %131 in 1 : vector<8x4xf32>, vector<8x32xf32> -> vector<8x36xf32>
    %134 = vector.extract_strided_slice %133 {offsets = [0, 0], sizes = [8, 32], strides = [1, 1]} : vector<8x36xf32> to vector<8x32xf32>
    %cst_54 = arith.constant 0.000000e+00 : f32
    %135 = vector.shape_cast %104 : vector<1x32xi1> to vector<1x32xi1>
    %136 = vector.broadcast %135 : vector<1x32xi1> to vector<8x32xi1>
    %137 = vector.broadcast %cst_54 : f32 to vector<8x32xf32>
    %138 = arith.select %136, %134, %137 : vector<8x32xi1>, vector<8x32xf32>
    %139 = vector.extract_strided_slice %133 {offsets = [0, 2], sizes = [8, 32], strides = [1, 1]} : vector<8x36xf32> to vector<8x32xf32>
    %cst_55 = arith.constant 0.000000e+00 : f32
    %140 = vector.shape_cast %106 : vector<1x32xi1> to vector<1x32xi1>
    %141 = vector.broadcast %140 : vector<1x32xi1> to vector<8x32xi1>
    %142 = vector.broadcast %cst_55 : f32 to vector<8x32xf32>
    %143 = arith.select %141, %139, %142 : vector<8x32xi1>, vector<8x32xf32>
    %144 = vector.extract_strided_slice %133 {offsets = [0, 4], sizes = [8, 32], strides = [1, 1]} : vector<8x36xf32> to vector<8x32xf32>
    %cst_56 = arith.constant 0.000000e+00 : f32
    %145 = vector.shape_cast %108 : vector<1x32xi1> to vector<1x32xi1>
    %146 = vector.broadcast %145 : vector<1x32xi1> to vector<8x32xi1>
    %147 = vector.broadcast %cst_56 : f32 to vector<8x32xf32>
    %148 = arith.select %146, %144, %147 : vector<8x32xi1>, vector<8x32xf32>
    %149 = tpu.concatenate %138, %143, %148 in 0 : vector<8x32xf32>, vector<8x32xf32>, vector<8x32xf32> -> vector<24x32xf32>
    %cst_57 = arith.constant dense<0.000000e+00> : vector<8x32xf32>
    %150 = tpu.matmul %84, %149, %cst_57 {dimension_numbers = #tpu.dot_dimension_numbers<[1], [0], [0], [1], [0, 0, 1, 1], [], []>} : vector<8x24xf32>, vector<24x32xf32>, vector<8x32xf32> -> vector<8x32xf32>
    %151 = vector.broadcast %85 : vector<8x1xf32> to vector<8x32xf32>
    %152 = arith.addf %150, %151 : vector<8x32xf32>
    %cst_58 = arith.constant 0.000000e+00 : f32
    %153 = vector.broadcast %cst_58 : f32 to vector<8x32xf32>
    %154 = arith.maximumf %152, %153 : vector<8x32xf32>
    %155 = arith.addf %154, %81 : vector<8x32xf32>
    %cst_59 = arith.constant 0.000000e+00 : f32
    %156 = vector.broadcast %cst_59 : f32 to vector<8x32xf32>
    %157 = arith.maximumf %155, %156 : vector<8x32xf32>
    %c0_60 = arith.constant 0 : index
    %c0_61 = arith.constant 0 : index
    %158 = vector.load %arg11[%c0_60, %c0_61] : memref<8x32xf32, #tpu.memory_space<vmem>>, vector<8x32xf32>
    tpu.vector_store %arg11[%c0_60, %c0_61], %157 {strides = array<i32>} : memref<8x32xf32, #tpu.memory_space<vmem>>, vector<8x32xf32>,
    return
  }
}

</mosaic_0001>

<llo_original>
// kernel: tpu_custom_call.1
$region0: #{tpu_custom_call.1}
  #allocation0 [shape = 'u32[]', space=smem, size = 0x4, offset = 0x4, fixed_abs, tag = 'smem constant byte address 0x4 - core index']
  #allocation1 [shape = 'u32[144,128]{1,0:T(1,128)}', space=vmem, size = 0x12000, scoped, tag = 'internal scratch']
  %s0 = inlined_call_operand.vmem [shape: f32[4,32], index: 0, kind: input, shape index: {}]
  %s1 = inlined_call_operand.vmem [shape: f32[8,12], index: 1, kind: input, shape index: {}]
  %s2 = inlined_call_operand.vmem [shape: f32[8,1], index: 2, kind: input, shape index: {}]
  %s3 = inlined_call_operand.vmem [shape: f32[8,24], index: 3, kind: input, shape index: {}]
  %s4 = inlined_call_operand.vmem [shape: f32[8,1], index: 4, kind: input, shape index: {}]
  %s5 = inlined_call_operand.vmem [shape: f32[8,4], index: 5, kind: input, shape index: {}]
  %s6 = inlined_call_operand.vmem [shape: f32[8,1], index: 6, kind: input, shape index: {}]
  %s7 = inlined_call_operand.vmem [shape: f32[8,24], index: 7, kind: input, shape index: {}]
  %s8 = inlined_call_operand.vmem [shape: f32[8,1], index: 8, kind: input, shape index: {}]
  %s9 = inlined_call_operand.vmem [shape: f32[8,24], index: 9, kind: input, shape index: {}]
  %s10 = inlined_call_operand.vmem [shape: f32[8,1], index: 10, kind: input, shape index: {}]
  %s11 = inlined_call_operand.hbm [shape: f32[8,32], index: 11, kind: output, shape index: {}]
  %s12 = sld [smem:[#allocation0]]
  $region54: #{tpu_custom_call.1} parent=0
    _
  %s14 = ssub.s32 1, %s12
  %s15 = scalar_select 0, %s14, %s12
  $region1: #{tpu_custom_call.1} parent=0
    #allocation2 [shape = 'u8[4096]{0}', space=vmem, size = 0x1000, scoped, tag = 'output window, operand 0, single buffered']
    #allocation3 [shape = 's32[1]{0}', space=sflag, size = 0x4, scoped, tag = 'scoped memory for tpu_custom_call.1']
    %16 = vsyncpa [#allocation3], 0
    // Predicated region
    $region2: #{tpu_custom_call.1} parent=1 // pred_check
      _
    $region3: #{tpu_custom_call.1} parent=1 // pred_check_branch
      %18 = sbr.rel (0) target = $region5
    $region4: #{tpu_custom_call.1} parent=1 // pred_region
      _
    $region5: #{tpu_custom_call.1} parent=1 // pred_fallthru
      _
    // Predicated region
    $region6: #{tpu_custom_call.1} parent=1 // pred_check
      _
    $region7: #{tpu_custom_call.1} parent=1 // pred_check_branch
      %20 = sbr.rel (0) target = $region9
    $region8: #{tpu_custom_call.1} parent=1 // pred_region
      _
    $region9: #{tpu_custom_call.1} parent=1 // pred_fallthru
      _
    // Predicated region
    $region10: #{tpu_custom_call.1} parent=1 // pred_check
      _
    $region11: #{tpu_custom_call.1} parent=1 // pred_check_branch
      %22 = sbr.rel (0) target = $region13
    $region12: #{tpu_custom_call.1} parent=1 // pred_region
      _
    $region13: #{tpu_custom_call.1} parent=1 // pred_fallthru
      _
    // Predicated region
    $region14: #{tpu_custom_call.1} parent=1 // pred_check
      _
    $region15: #{tpu_custom_call.1} parent=1 // pred_check_branch
      %24 = sbr.rel (0) target = $region17
    $region16: #{tpu_custom_call.1} parent=1 // pred_region
      _
    $region17: #{tpu_custom_call.1} parent=1 // pred_fallthru
      _
    // Predicated region
    $region18: #{tpu_custom_call.1} parent=1 // pred_check
      _
    $region19: #{tpu_custom_call.1} parent=1 // pred_check_branch
      %26 = sbr.rel (0) target = $region21
    $region20: #{tpu_custom_call.1} parent=1 // pred_region
      _
    $region21: #{tpu_custom_call.1} parent=1 // pred_fallthru
      _
    // Predicated region
    $region22: #{tpu_custom_call.1} parent=1 // pred_check
      _
    $region23: #{tpu_custom_call.1} parent=1 // pred_check_branch
      %28 = sbr.rel (0) target = $region25
    $region24: #{tpu_custom_call.1} parent=1 // pred_region
      _
    $region25: #{tpu_custom_call.1} parent=1 // pred_fallthru
      _
    // Predicated region
    $region26: #{tpu_custom_call.1} parent=1 // pred_check
      _
    $region27: #{tpu_custom_call.1} parent=1 // pred_check_branch
      %30 = sbr.rel (0) target = $region29
    $region28: #{tpu_custom_call.1} parent=1 // pred_region
      _
    $region29: #{tpu_custom_call.1} parent=1 // pred_fallthru
      _
    // Predicated region
    $region30: #{tpu_custom_call.1} parent=1 // pred_check
      _
    $region31: #{tpu_custom_call.1} parent=1 // pred_check_branch
      %32 = sbr.rel (0) target = $region33
    $region32: #{tpu_custom_call.1} parent=1 // pred_region
      _
    $region33: #{tpu_custom_call.1} parent=1 // pred_fallthru
      _
    // Predicated region
    $region34: #{tpu_custom_call.1} parent=1 // pred_check
      _
    $region35: #{tpu_custom_call.1} parent=1 // pred_check_branch
      %34 = sbr.rel (0) target = $region37
    $region36: #{tpu_custom_call.1} parent=1 // pred_region
      _
    $region37: #{tpu_custom_call.1} parent=1 // pred_fallthru
      _
    // Predicated region
    $region38: #{tpu_custom_call.1} parent=1 // pred_check
      _
    $region39: #{tpu_custom_call.1} parent=1 // pred_check_branch
      %36 = sbr.rel (0) target = $region41
    $region40: #{tpu_custom_call.1} parent=1 // pred_region
      _
    $region41: #{tpu_custom_call.1} parent=1 // pred_fallthru
      _
    // Predicated region
    $region42: #{tpu_custom_call.1} parent=1 // pred_check
      _
    $region43: #{tpu_custom_call.1} parent=1 // pred_check_branch
      %38 = sbr.rel (0) target = $region45
    $region44: #{tpu_custom_call.1} parent=1 // pred_region
      _
    $region45: #{tpu_custom_call.1} parent=1 // pred_fallthru
      _
    %v39 = vld [vmem:[%s0] sm:$0xf]
    %v40 = vld [vmem:[%s1] sm:$0xff]
    %v41 = vld [vmem:[%s2] sm:$0xff]
    %v42 = vld [vmem:[%s3] sm:$0xff]
    %v43 = vld [vmem:[%s4] sm:$0xff]
    %v44 = vld [vmem:[%s5] sm:$0xff]
    %v45 = vld [vmem:[%s6] sm:$0xff]
    %v46 = vlaneseq
    %v47 = vand.u32 %v46, 127
    %vm48 = vcmp.lt.s32.totalorder %v47, 0
    %v49 = vsub.s32 0, %v47
    %v50 = vsel %vm48, %v49, %v47
    %v51 = vshrl.u32 %v50, 4
    %v52 = vand.u32 %v50, 15
    %v53 = vsub.s32 0, %v52
    %v54 = vsel %vm48, %v53, %v52
    %vm55 = vcmp.ne.s32.totalorder %v54, 0
    %vm56 = vcmp.lt.s32.totalorder %v54, 0
    %vm57 = vmand %vm56, %vm55
    %v58 = vadd.s32 %v54, 16
    %v59 = vsel %vm57, %v58, %v54
    %vm60 = vcmp.ge.s32.totalorder %v59, 2
    %vm61 = vcmp.ge.s32.totalorder %v59, 1
    %vm62 = vcmp.ge.s32.totalorder %v59, 0
    %64 = vrot.lane.b32.xlu0 %v39, 2
    %v65 = vpop.permute.xlu0 %64
    %vm67 = vcmask 15360
    %v68 = vsel %vm67, 0.0, %v65
    %v69 = vsel %vm60, 1, 0
    %vm70 = vcmp.eq.s32.totalorder %v69, 1
    %v71 = vsel %vm70, %v68, 0.0
    %v72 = vsel %vm61, 1, 0
    %vm73 = vcmp.eq.s32.totalorder %v72, 1
    %75 = vrot.lane.b32.xlu0 %v68, 127
    %v76 = vpop.permute.xlu0 %75
    %v78 = vsel %vm73, %v76, 0.0
    %v79 = vsel %vm62, 1, 0
    %vm80 = vcmp.eq.s32.totalorder %v79, 1
    %81 = vrot.lane.b32.xlu0 %v68, 126
    %v82 = vpop.permute.xlu0 %81
    %v84 = vsel %vm80, %v82, 0.0
    %v86 = vrot.slane %v78, 4
    %vm88 = vcmask 1043456
    %v89 = vsel %vm88, %v71, %v86
    %91 = vset.pattern.permute.xlu0 0
    %92 = vperm.xlu0 %91, %v41
    %v93 = vpop.permute.xlu0 %92
    %vm95 = vcmask 97280
    %v97 = vsel %vm95, %v40, 0
    %v100 = vsel %vm88, %v84, 0
    %102 = vmatprep.subr.mxu0 0.0
    %103 = vmatpush1.msra.mxu0 %v89
    %104 = vmatprep.subr.mxu0 0.0
    %105 = vmatpush1.msra.mxu0 %v100
    %106 = vmatprep.subr.mxu0 0.0
    %107 = vmatpush1.msra.mxu0 0.0
    %108 = vmatprep.subr.mxu0 0.0
    %109 = vmatpush1.msra.mxu0 0.0
    %110 = vmatprep.subr.mxu0 0.0
    %111 = vmatpush1.msra.mxu0 0.0
    %112 = vmatprep.subr.mxu0 0.0
    %113 = vmatpush1.msra.mxu0 0.0
    %114 = vmatprep.subr.mxu0 0.0
    %115 = vmatpush1.msra.mxu0 0.0
    %116 = vmatprep.subr.mxu0 0.0
    %117 = vmatpush1.msra.mxu0 0.0
    %118 = vmatprep.subr.mxu0 0.0
    %119 = vmatpush1.msra.mxu0 0.0
    %120 = vmatprep.subr.mxu0 0.0
    %121 = vmatpush1.msra.mxu0 0.0
    %122 = vmatprep.subr.mxu0 0.0
    %123 = vmatpush1.msra.mxu0 0.0
    %124 = vmatprep.subr.mxu0 0.0
    %125 = vmatpush1.msra.mxu0 0.0
    %126 = vmatprep.subr.mxu0 0.0
    %127 = vmatpush1.msra.mxu0 0.0
    %128 = vmatprep.subr.mxu0 0.0
    %129 = vmatpush1.msra.mxu0 0.0
    %130 = vmatprep.subr.mxu0 0.0
    %131 = vmatpush1.msra.mxu0 0.0
    %132 = vmatprep.subr.mxu0 0.0
    %133 = vmatpush1.msra.mxu0 0.0
    %134 = vmatprep.subr.mxu0 0.0
    %135 = vmatpush1.msra.mxu0 0.0
    %136 = vmatprep.subr.mxu0 0.0
    %137 = vmatpush1.msra.mxu0 0.0
    %138 = vmatprep.subr.mxu0 0.0
    %139 = vmatpush1.msra.mxu0 0.0
    %140 = vmatprep.subr.mxu0 0.0
    %141 = vmatpush1.msra.mxu0 0.0
    %142 = vmatprep.subr.mxu0 0.0
    %143 = vmatpush1.msra.mxu0 0.0
    %144 = vmatprep.subr.mxu0 0.0
    %145 = vmatpush1.msra.mxu0 0.0
    %146 = vmatprep.subr.mxu0 0.0
    %147 = vmatpush1.msra.mxu0 0.0
    %148 = vmatprep.subr.mxu0 0.0
    %149 = vmatpush1.msra.mxu0 0.0
    %150 = vmatprep.subr.mxu0 0.0
    %151 = vmatpush1.msra.mxu0 0.0
    %152 = vmatprep.subr.mxu0 0.0
    %153 = vmatpush1.msra.mxu0 0.0
    %154 = vmatprep.subr.mxu0 0.0
    %155 = vmatpush1.msra.mxu0 0.0
    %156 = vmatprep.subr.mxu0 0.0
    %157 = vmatpush1.msra.mxu0 0.0
    %158 = vmatprep.subr.mxu0 0.0
    %159 = vmatpush1.msra.mxu0 0.0
    %160 = vmatprep.subr.mxu0 0.0
    %161 = vmatpush1.msra.mxu0 0.0
    %162 = vmatprep.subr.mxu0 0.0
    %163 = vmatpush1.msra.mxu0 0.0
    %164 = vmatprep.subr.mxu0 0.0
    %165 = vmatpush1.msra.mxu0 0.0
    %166 = vmatprep.mubr.f32.mxu0 0.0
    %167 = vmatmul.mubr.f32.gmra.mrb[0].mxu0 %v97
    %v168 = vpop.f32.mrb[0].mxu0
    %v169 = vadd.f32 %v93, %v168
    %v170 = vpop.f32.mrb[0].mxu0
    %171 = vdwg.mxu0
    %v172 = vmax.f32 %v169, 0.0
    %174 = vrot.lane.b32.xlu0 %v172, 2
    %v175 = vpop.permute.xlu0 %174
    %v177 = vsel %vm67, 0.0, %v175
    %v178 = vsel %vm70, %v177, 0.0
    %180 = vrot.lane.b32.xlu0 %v177, 127
    %v181 = vpop.permute.xlu0 %180
    %v183 = vsel %vm73, %v181, 0.0
    %184 = vrot.lane.b32.xlu0 %v177, 126
    %v185 = vpop.permute.xlu0 %184
    %v187 = vsel %vm80, %v185, 0.0
    %189 = vset.pattern.permute.xlu0 0
    %190 = vperm.xlu0 %189, %v43
    %v191 = vpop.permute.xlu0 %190
    %vm193 = vcmask 195584
    %v195 = vsel %vm193, %v42, 0
    %197 = vmatprep.subr.mxu0 0.0
    %198 = vmatpush1.msra.mxu0 %v178
    %199 = vmatprep.subr.mxu0 0.0
    %200 = vmatpush1.msra.mxu0 %v183
    %201 = vmatprep.subr.mxu0 0.0
    %202 = vmatpush1.msra.mxu0 %v187
    %203 = vmatprep.subr.mxu0 0.0
    %204 = vmatpush1.msra.mxu0 0.0
    %205 = vmatprep.subr.mxu0 0.0
    %206 = vmatpush1.msra.mxu0 0.0
    %207 = vmatprep.subr.mxu0 0.0
    %208 = vmatpush1.msra.mxu0 0.0
    %209 = vmatprep.subr.mxu0 0.0
    %210 = vmatpush1.msra.mxu0 0.0
    %211 = vmatprep.subr.mxu0 0.0
    %212 = vmatpush1.msra.mxu0 0.0
    %213 = vmatprep.subr.mxu0 0.0
    %214 = vmatpush1.msra.mxu0 0.0
    %215 = vmatprep.subr.mxu0 0.0
    %216 = vmatpush1.msra.mxu0 0.0
    %217 = vmatprep.subr.mxu0 0.0
    %218 = vmatpush1.msra.mxu0 0.0
    %219 = vmatprep.subr.mxu0 0.0
    %220 = vmatpush1.msra.mxu0 0.0
    %221 = vmatprep.subr.mxu0 0.0
    %222 = vmatpush1.msra.mxu0 0.0
    %223 = vmatprep.subr.mxu0 0.0
    %224 = vmatpush1.msra.mxu0 0.0
    %225 = vmatprep.subr.mxu0 0.0
    %226 = vmatpush1.msra.mxu0 0.0
    %227 = vmatprep.subr.mxu0 0.0
    %228 = vmatpush1.msra.mxu0 0.0
    %229 = vmatprep.subr.mxu0 0.0
    %230 = vmatpush1.msra.mxu0 0.0
    %231 = vmatprep.subr.mxu0 0.0
    %232 = vmatpush1.msra.mxu0 0.0
    %233 = vmatprep.subr.mxu0 0.0
    %234 = vmatpush1.msra.mxu0 0.0
    %235 = vmatprep.subr.mxu0 0.0
    %236 = vmatpush1.msra.mxu0 0.0
    %237 = vmatprep.subr.mxu0 0.0
    %238 = vmatpush1.msra.mxu0 0.0
    %239 = vmatprep.subr.mxu0 0.0
    %240 = vmatpush1.msra.mxu0 0.0
    %241 = vmatprep.subr.mxu0 0.0
    %242 = vmatpush1.msra.mxu0 0.0
    %243 = vmatprep.subr.mxu0 0.0
    %244 = vmatpush1.msra.mxu0 0.0
    %245 = vmatprep.subr.mxu0 0.0
    %246 = vmatpush1.msra.mxu0 0.0
    %247 = vmatprep.subr.mxu0 0.0
    %248 = vmatpush1.msra.mxu0 0.0
    %249 = vmatprep.subr.mxu0 0.0
    %250 = vmatpush1.msra.mxu0 0.0
    %251 = vmatprep.subr.mxu0 0.0
    %252 = vmatpush1.msra.mxu0 0.0
    %253 = vmatprep.subr.mxu0 0.0
    %254 = vmatpush1.msra.mxu0 0.0
    %255 = vmatprep.subr.mxu0 0.0
    %256 = vmatpush1.msra.mxu0 0.0
    %257 = vmatprep.subr.mxu0 0.0
    %258 = vmatpush1.msra.mxu0 0.0
    %259 = vmatprep.subr.mxu0 0.0
    %260 = vmatpush1.msra.mxu0 0.0
    %261 = vmatprep.mubr.f32.mxu0 0.0
    %262 = vmatmul.mubr.f32.gmra.mrb[0].mxu0 %v195
    %v263 = vpop.f32.mrb[0].mxu0
    %v264 = vadd.f32 %v191, %v263
    %v265 = vpop.f32.mrb[0].mxu0
    %266 = vdwg.mxu0
    %v267 = vmax.f32 %v264, 0.0
    %269 = vset.pattern.permute.xlu0 0
    %270 = vperm.xlu0 %269, %v45
    %v271 = vpop.permute.xlu0 %270
    %vm273 = vcmask 31744
    %v275 = vsel %vm273, %v44, 0
    %v277 = vsel %vm88, %v39, 0
    %279 = vmatprep.subr.mxu0 0.0
    %280 = vmatpush1.msra.mxu0 %v277
    %281 = vmatprep.subr.mxu0 0.0
    %282 = vmatpush1.msra.mxu0 0.0
    %283 = vmatprep.subr.mxu0 0.0
    %284 = vmatpush1.msra.mxu0 0.0
    %285 = vmatprep.subr.mxu0 0.0
    %286 = vmatpush1.msra.mxu0 0.0
    %287 = vmatprep.subr.mxu0 0.0
    %288 = vmatpush1.msra.mxu0 0.0
    %289 = vmatprep.subr.mxu0 0.0
    %290 = vmatpush1.msra.mxu0 0.0
    %291 = vmatprep.subr.mxu0 0.0
    %292 = vmatpush1.msra.mxu0 0.0
    %293 = vmatprep.subr.mxu0 0.0
    %294 = vmatpush1.msra.mxu0 0.0
    %295 = vmatprep.subr.mxu0 0.0
    %296 = vmatpush1.msra.mxu0 0.0
    %297 = vmatprep.subr.mxu0 0.0
    %298 = vmatpush1.msra.mxu0 0.0
    %299 = vmatprep.subr.mxu0 0.0
    %300 = vmatpush1.msra.mxu0 0.0
    %301 = vmatprep.subr.mxu0 0.0
    %302 = vmatpush1.msra.mxu0 0.0
    %303 = vmatprep.subr.mxu0 0.0
    %304 = vmatpush1.msra.mxu0 0.0
    %305 = vmatprep.subr.mxu0 0.0
    %306 = vmatpush1.msra.mxu0 0.0
    %307 = vmatprep.subr.mxu0 0.0
    %308 = vmatpush1.msra.mxu0 0.0
    %309 = vmatprep.subr.mxu0 0.0
    %310 = vmatpush1.msra.mxu0 0.0
    %311 = vmatprep.subr.mxu0 0.0
    %312 = vmatpush1.msra.mxu0 0.0
    %313 = vmatprep.subr.mxu0 0.0
    %314 = vmatpush1.msra.mxu0 0.0
    %315 = vmatprep.subr.mxu0 0.0
    %316 = vmatpush1.msra.mxu0 0.0
    %317 = vmatprep.subr.mxu0 0.0
    %318 = vmatpush1.msra.mxu0 0.0
    %319 = vmatprep.subr.mxu0 0.0
    %320 = vmatpush1.msra.mxu0 0.0
    %321 = vmatprep.subr.mxu0 0.0
    %322 = vmatpush1.msra.mxu0 0.0
    %323 = vmatprep.subr.mxu0 0.0
    %324 = vmatpush1.msra.mxu0 0.0
    %325 = vmatprep.subr.mxu0 0.0
    %326 = vmatpush1.msra.mxu0 0.0
    %327 = vmatprep.subr.mxu0 0.0
    %328 = vmatpush1.msra.mxu0 0.0
    %329 = vmatprep.subr.mxu0 0.0
    %330 = vmatpush1.msra.mxu0 0.0
    %331 = vmatprep.subr.mxu0 0.0
    %332 = vmatpush1.msra.mxu0 0.0
    %333 = vmatprep.subr.mxu0 0.0
    %334 = vmatpush1.msra.mxu0 0.0
    %335 = vmatprep.subr.mxu0 0.0
    %336 = vmatpush1.msra.mxu0 0.0
    %337 = vmatprep.subr.mxu0 0.0
    %338 = vmatpush1.msra.mxu0 0.0
    %339 = vmatprep.subr.mxu0 0.0
    %340 = vmatpush1.msra.mxu0 0.0
    %341 = vmatprep.subr.mxu0 0.0
    %342 = vmatpush1.msra.mxu0 0.0
    %343 = vmatprep.mubr.f32.mxu0 0.0
    %344 = vmatmul.mubr.f32.gmra.mrb[0].mxu0 %v275
    %v345 = vpop.f32.mrb[0].mxu0
    %v346 = vadd.f32 %v271, %v345
    %v347 = vpop.f32.mrb[0].mxu0
    %348 = vdwg.mxu0
    %v349 = vadd.f32 %v267, %v346
    %v350 = vmax.f32 %v349, 0.0
    %v351 = vld [vmem:[%s7] sm:$0xff]
    %v352 = vld [vmem:[%s8] sm:$0xff]
    %v353 = vld [vmem:[%s9] sm:$0xff]
    %v354 = vld [vmem:[%s10] sm:$0xff]
    %vm355 = vcmp.ge.s32.totalorder %v59, 4
    %357 = vrot.lane.b32.xlu0 %v350, 4
    %v358 = vpop.permute.xlu0 %357
    %v360 = vsel %vm273, 0.0, %v358
    %v361 = vsel %vm355, 1, 0
    %vm362 = vcmp.eq.s32.totalorder %v361, 1
    %v363 = vsel %vm362, %v360, 0.0
    %365 = vrot.lane.b32.xlu0 %v360, 126
    %v366 = vpop.permute.xlu0 %365
    %v368 = vsel %vm70, %v366, 0.0
    %369 = vrot.lane.b32.xlu0 %v360, 124
    %v370 = vpop.permute.xlu0 %369
    %v372 = vsel %vm80, %v370, 0.0
    %374 = vset.pattern.permute.xlu0 0
    %375 = vperm.xlu0 %374, %v352
    %v376 = vpop.permute.xlu0 %375
    %v379 = vsel %vm193, %v351, 0
    %381 = vmatprep.subr.mxu0 0.0
    %382 = vmatpush1.msra.mxu0 %v363
    %383 = vmatprep.subr.mxu0 0.0
    %384 = vmatpush1.msra.mxu0 %v368
    %385 = vmatprep.subr.mxu0 0.0
    %386 = vmatpush1.msra.mxu0 %v372
    %387 = vmatprep.subr.mxu0 0.0
    %388 = vmatpush1.msra.mxu0 0.0
    %389 = vmatprep.subr.mxu0 0.0
    %390 = vmatpush1.msra.mxu0 0.0
    %391 = vmatprep.subr.mxu0 0.0
    %392 = vmatpush1.msra.mxu0 0.0
    %393 = vmatprep.subr.mxu0 0.0
    %394 = vmatpush1.msra.mxu0 0.0
    %395 = vmatprep.subr.mxu0 0.0
    %396 = vmatpush1.msra.mxu0 0.0
    %397 = vmatprep.subr.mxu0 0.0
    %398 = vmatpush1.msra.mxu0 0.0
    %399 = vmatprep.subr.mxu0 0.0
    %400 = vmatpush1.msra.mxu0 0.0
    %401 = vmatprep.subr.mxu0 0.0
    %402 = vmatpush1.msra.mxu0 0.0
    %403 = vmatprep.subr.mxu0 0.0
    %404 = vmatpush1.msra.mxu0 0.0
    %405 = vmatprep.subr.mxu0 0.0
    %406 = vmatpush1.msra.mxu0 0.0
    %407 = vmatprep.subr.mxu0 0.0
    %408 = vmatpush1.msra.mxu0 0.0
    %409 = vmatprep.subr.mxu0 0.0
    %410 = vmatpush1.msra.mxu0 0.0
    %411 = vmatprep.subr.mxu0 0.0
    %412 = vmatpush1.msra.mxu0 0.0
    %413 = vmatprep.subr.mxu0 0.0
    %414 = vmatpush1.msra.mxu0 0.0
    %415 = vmatprep.subr.mxu0 0.0
    %416 = vmatpush1.msra.mxu0 0.0
    %417 = vmatprep.subr.mxu0 0.0
    %418 = vmatpush1.msra.mxu0 0.0
    %419 = vmatprep.subr.mxu0 0.0
    %420 = vmatpush1.msra.mxu0 0.0
    %421 = vmatprep.subr.mxu0 0.0
    %422 = vmatpush1.msra.mxu0 0.0
    %423 = vmatprep.subr.mxu0 0.0
    %424 = vmatpush1.msra.mxu0 0.0
    %425 = vmatprep.subr.mxu0 0.0
    %426 = vmatpush1.msra.mxu0 0.0
    %427 = vmatprep.subr.mxu0 0.0
    %428 = vmatpush1.msra.mxu0 0.0
    %429 = vmatprep.subr.mxu0 0.0
    %430 = vmatpush1.msra.mxu0 0.0
    %431 = vmatprep.subr.mxu0 0.0
    %432 = vmatpush1.msra.mxu0 0.0
    %433 = vmatprep.subr.mxu0 0.0
    %434 = vmatpush1.msra.mxu0 0.0
    %435 = vmatprep.subr.mxu0 0.0
    %436 = vmatpush1.msra.mxu0 0.0
    %437 = vmatprep.subr.mxu0 0.0
    %438 = vmatpush1.msra.mxu0 0.0
    %439 = vmatprep.subr.mxu0 0.0
    %440 = vmatpush1.msra.mxu0 0.0
    %441 = vmatprep.subr.mxu0 0.0
    %442 = vmatpush1.msra.mxu0 0.0
    %443 = vmatprep.subr.mxu0 0.0
    %444 = vmatpush1.msra.mxu0 0.0
    %445 = vmatprep.mubr.f32.mxu0 0.0
    %446 = vmatmul.mubr.f32.gmra.mrb[0].mxu0 %v379
    %v447 = vpop.f32.mrb[0].mxu0
    %v448 = vadd.f32 %v376, %v447
    %v449 = vpop.f32.mrb[0].mxu0
    %450 = vdwg.mxu0
    %v451 = vmax.f32 %v448, 0.0
    %453 = vrot.lane.b32.xlu0 %v451, 4
    %v454 = vpop.permute.xlu0 %453
    %v456 = vsel %vm273, 0.0, %v454
    %v457 = vsel %vm362, %v456, 0.0
    %459 = vrot.lane.b32.xlu0 %v456, 126
    %v460 = vpop.permute.xlu0 %459
    %v462 = vsel %vm70, %v460, 0.0
    %463 = vrot.lane.b32.xlu0 %v456, 124
    %v464 = vpop.permute.xlu0 %463
    %v466 = vsel %vm80, %v464, 0.0
    %468 = vset.pattern.permute.xlu0 0
    %469 = vperm.xlu0 %468, %v354
    %v470 = vpop.permute.xlu0 %469
    %v473 = vsel %vm193, %v353, 0
    %475 = vmatprep.subr.mxu0 0.0
    %476 = vmatpush1.msra.mxu0 %v457
    %477 = vmatprep.subr.mxu0 0.0
    %478 = vmatpush1.msra.mxu0 %v462
    %479 = vmatprep.subr.mxu0 0.0
    %480 = vmatpush1.msra.mxu0 %v466
    %481 = vmatprep.subr.mxu0 0.0
    %482 = vmatpush1.msra.mxu0 0.0
    %483 = vmatprep.subr.mxu0 0.0
    %484 = vmatpush1.msra.mxu0 0.0
    %485 = vmatprep.subr.mxu0 0.0
    %486 = vmatpush1.msra.mxu0 0.0
    %487 = vmatprep.subr.mxu0 0.0
    %488 = vmatpush1.msra.mxu0 0.0
    %489 = vmatprep.subr.mxu0 0.0
    %490 = vmatpush1.msra.mxu0 0.0
    %491 = vmatprep.subr.mxu0 0.0
    %492 = vmatpush1.msra.mxu0 0.0
    %493 = vmatprep.subr.mxu0 0.0
    %494 = vmatpush1.msra.mxu0 0.0
    %495 = vmatprep.subr.mxu0 0.0
    %496 = vmatpush1.msra.mxu0 0.0
    %497 = vmatprep.subr.mxu0 0.0
    %498 = vmatpush1.msra.mxu0 0.0
    %499 = vmatprep.subr.mxu0 0.0
    %500 = vmatpush1.msra.mxu0 0.0
    %501 = vmatprep.subr.mxu0 0.0
    %502 = vmatpush1.msra.mxu0 0.0
    %503 = vmatprep.subr.mxu0 0.0
    %504 = vmatpush1.msra.mxu0 0.0
    %505 = vmatprep.subr.mxu0 0.0
    %506 = vmatpush1.msra.mxu0 0.0
    %507 = vmatprep.subr.mxu0 0.0
    %508 = vmatpush1.msra.mxu0 0.0
    %509 = vmatprep.subr.mxu0 0.0
    %510 = vmatpush1.msra.mxu0 0.0
    %511 = vmatprep.subr.mxu0 0.0
    %512 = vmatpush1.msra.mxu0 0.0
    %513 = vmatprep.subr.mxu0 0.0
    %514 = vmatpush1.msra.mxu0 0.0
    %515 = vmatprep.subr.mxu0 0.0
    %516 = vmatpush1.msra.mxu0 0.0
    %517 = vmatprep.subr.mxu0 0.0
    %518 = vmatpush1.msra.mxu0 0.0
    %519 = vmatprep.subr.mxu0 0.0
    %520 = vmatpush1.msra.mxu0 0.0
    %521 = vmatprep.subr.mxu0 0.0
    %522 = vmatpush1.msra.mxu0 0.0
    %523 = vmatprep.subr.mxu0 0.0
    %524 = vmatpush1.msra.mxu0 0.0
    %525 = vmatprep.subr.mxu0 0.0
    %526 = vmatpush1.msra.mxu0 0.0
    %527 = vmatprep.subr.mxu0 0.0
    %528 = vmatpush1.msra.mxu0 0.0
    %529 = vmatprep.subr.mxu0 0.0
    %530 = vmatpush1.msra.mxu0 0.0
    %531 = vmatprep.subr.mxu0 0.0
    %532 = vmatpush1.msra.mxu0 0.0
    %533 = vmatprep.subr.mxu0 0.0
    %534 = vmatpush1.msra.mxu0 0.0
    %535 = vmatprep.subr.mxu0 0.0
    %536 = vmatpush1.msra.mxu0 0.0
    %537 = vmatprep.subr.mxu0 0.0
    %538 = vmatpush1.msra.mxu0 0.0
    %539 = vmatprep.mubr.f32.mxu0 0.0
    %540 = vmatmul.mubr.f32.gmra.mrb[0].mxu0 %v473
    %v541 = vpop.f32.mrb[0].mxu0
    %v542 = vadd.f32 %v470, %v541
    %v543 = vpop.f32.mrb[0].mxu0
    %544 = vdwg.mxu0
    %v545 = vmax.f32 %v542, 0.0
    %v546 = vadd.f32 %v545, %v350
    %v547 = vmax.f32 %v546, 0.0
    %vm548 = vcmask 261120
    %549 = vst.msk [vmem:[#allocation2] sm:$0xff] %vm548, %v547
    // Predicated region
    $region46: #{tpu_custom_call.1} parent=1 // pred_check
      _
    $region47: #{tpu_custom_call.1} parent=1 // pred_check_branch
      %551 = sbr.rel (0) target = $region49
    $region48: #{tpu_custom_call.1} parent=1 // pred_region
      %s553 = ssub.s32 128, 128
      %554 = vsyncadd [#allocation3], %s553
      %s556 = sshll.u32 [#allocation2], 4
      %s557 = int_to_ptr.vmem [resolvable:$true] %s556
      %559 = dma.vmem_to_hbm [thread:$0]  %s557, 128, %s11, [#allocation3]
    $region49: #{tpu_custom_call.1} parent=1 // pred_fallthru
      _
    // Predicated region
    $region50: #{tpu_custom_call.1} parent=1 // pred_check
      _
    $region51: #{tpu_custom_call.1} parent=1 // pred_check_branch
      %561 = sbr.rel (0) target = $region53
    $region52: #{tpu_custom_call.1} parent=1 // pred_region
      %562 = dma.done [#allocation3], 128
    $region53: #{tpu_custom_call.1} parent=1 // pred_fallthru
      _
    %563 = vsyncpa [#allocation3], 1

</llo_original>
